<compile_context>
chip_gen: v7x
topology: tpu7x:2x2x1
jax: 0.10.0
libtpu: 0.0.40
codegen_flags: <defaults>
</compile_context>

<pallas_src>
import functools

import jax
import jax.numpy as jnp
from jax import lax
from jax.experimental import pallas as pl
from jax.experimental.pallas import tpu as pltpu


def _shift_next(x, axis, use_hw_roll):
    """Returns x shifted so position i holds x[i + 1] along `axis` (wraps)."""
    n = x.shape[axis]
    if n <= 1:
        return x
    if use_hw_roll:
        # XLU rotate: keeps everything (8, 128)-aligned, no relayout traffic.
        return pltpu.roll(x, n - 1, axis=axis)
    # Fallback for small / unaligned dims (lowers to slice + concat).
    return jnp.roll(x, -1, axis=axis)


def _tree_add(parts):
    while len(parts) > 1:
        nxt = [parts[i] + parts[i + 1] for i in range(0, len(parts) - 1, 2)]
        if len(parts) % 2:
            nxt.append(parts[-1])
        parts = nxt
    return parts[0]


def _fold_to_band(x):
    """Fold (TH, W) -> (8, W) by summing whole 8-row sublane bands.

    All slices sit on (8, .) sublane-tile boundaries, so this is pure VPU vreg
    adds — no cross-lane (XLU) work and no relayouts.
    """
    th, w = x.shape
    n8 = th // 8
    parts = [x[k * 8:(k + 1) * 8, :] for k in range(n8)]
    rem = th - n8 * 8
    if rem:
        # Only hit when the (single) H tile is not a multiple of 8 rows.
        tail = jnp.concatenate(
            [x[n8 * 8:, :], jnp.zeros((8 - rem, w), x.dtype)], axis=0)
        parts.append(tail)
    return _tree_add(parts)


def _depth_smooth_kernel(*refs, H, W, TH, C, inv_dx, inv_dy, use_hw_roll,
                         with_halo):
    if with_halo:
        d_ref, i_ref, dh_ref, ih_ref, out_ref = refs
    else:
        d_ref, i_ref, out_ref = refs
        dh_ref = ih_ref = None

    b = pl.program_id(1)
    row0 = b * TH
    f32 = jnp.float32

    # Narrow row/column masks; broadcast only inside the selects.
    local_rows = lax.broadcasted_iota(jnp.int32, (TH, 1), 0)       # (TH, 1)
    rows = row0 + local_rows                                       # (TH, 1)
    cols = lax.broadcasted_iota(jnp.int32, (1, W), 1)              # (1, W)
    last_local = local_rows == (TH - 1)

    d = d_ref[0, 0].astype(f32)                                    # (TH, W)

    # -------------------- x-direction term (full first) --------------------
    def dx(a):
        return a - _shift_next(a, axis=1, use_hw_roll=use_hw_roll)

    gx = jnp.abs(dx(i_ref[0, 0].astype(f32)))
    for c in range(1, C):
        gx = gx + jnp.abs(dx(i_ref[0, c].astype(f32)))
    wx = jnp.exp(gx * (-1.0 / C))                                  # EUP
    sx = jnp.abs(dx(d) * wx)
    sx = jnp.where(cols < (W - 1), sx, 0.0)      # wrapped last column -> 0
    if H % TH != 0:                              # padded rows of last tile -> 0
        sx = jnp.where(rows < H, sx, 0.0)
    band = _fold_to_band(sx) * inv_dx

    # -------------------- y-direction term --------------------
    def halo(ref, c):
        return None if ref is None else ref[0, c].astype(f32)

    def dy(a, halo_blk):
        nxt = _shift_next(a, axis=0, use_hw_roll=use_hw_roll)
        if halo_blk is not None:
            # Replace the wrapped last local row with the first row of the next
            # H-tile (halo block).  On the last tile it is masked out below.
            nxt = jnp.where(last_local, halo_blk[0:1, :], nxt)
        return a - nxt

    gy = jnp.abs(dy(i_ref[0, 0].astype(f32), halo(ih_ref, 0)))
    for c in range(1, C):
        gy = gy + jnp.abs(dy(i_ref[0, c].astype(f32), halo(ih_ref, c)))
    wy = jnp.exp(gy * (-1.0 / C))
    sy = jnp.abs(dy(d, halo(dh_ref, 0)) * wy)
    sy = jnp.where(rows < (H - 1), sy, 0.0)      # last row + any padding -> 0
    band = band + _fold_to_band(sy) * inv_dy

    out_ref[0, 0] = band.astype(out_ref.dtype)   # lane-dense (8, W) partial


def _choose_row_tile(H, W, C, itemsize):
    """Largest 8-row-multiple H-tile whose double-buffered inputs fit ~16 MiB."""
    budget = 16 * 1024 * 1024
    per_row = 2 * (1 + C) * W * itemsize         # x2: Pallas double-buffers
    th = (budget // max(per_row, 1)) // 8 * 8
    th = max(8, min(512, th))
    return H if H <= th else th


def depth_smoothness_loss(depth: jax.Array, image: jax.Array,
                          *, row_tile: int | None = None) -> jax.Array:
    """Pallas TPU implementation of DepthSmoothnessLoss.forward."""
    if depth.ndim != 4:
        raise ValueError(f"Invalid depth shape, expected NCHW. Got: {depth.shape}")
    if image.ndim != 4:
        raise ValueError(f"Invalid image shape, expected NCHW. Got: {image.shape}")
    if depth.shape[-2:] != image.shape[-2:]:
        raise ValueError("depth and image spatial shapes must match.")
    if depth.shape[0] != image.shape[0]:
        raise ValueError("depth and image batch sizes must match.")
    if depth.dtype != image.dtype:
        raise ValueError("depth and image must have the same dtype.")

    N, Cd, H, W = depth.shape
    _, Ci, _, _ = image.shape
    if Cd != 1:
        raise ValueError(f"depth must have a single channel (N,1,H,W). Got C={Cd}")

    if row_tile is None:
        TH = _choose_row_tile(H, W, Ci, jnp.dtype(depth.dtype).itemsize)
    else:
        if not (1 <= row_tile <= H):
            raise ValueError(f"row_tile must be in [1, {H}]. Got: {row_tile}")
        if row_tile != H and row_tile % 8 != 0:
            raise ValueError("row_tile must be a multiple of 8 or equal to H.")
        TH = row_tile

    grid_h = pl.cdiv(H, TH)
    with_halo = grid_h > 1                       # single-tile case: no halo DMA

    halo_bh = 8 if H >= 8 else H                 # sublane block size for halos
    halo_step = max(TH // halo_bh, 1)
    max_halo_idx = (H - 1) // halo_bh

    # torch.mean denominators over the full (N,1,H,W-1) / (N,1,H-1,W) tensors.
    den_x = N * H * (W - 1)
    den_y = N * (H - 1) * W
    inv_dx = 1.0 / den_x if den_x > 0 else 0.0
    inv_dy = 1.0 / den_y if den_y > 0 else 0.0

    # Hardware roll only on fully (8,128)-aligned tiles; safe fallback otherwise.
    use_hw_roll = (W % 128 == 0) and (TH % 8 == 0)

    kernel = functools.partial(
        _depth_smooth_kernel, H=H, W=W, TH=TH, C=Ci,
        inv_dx=inv_dx, inv_dy=inv_dy, use_hw_roll=use_hw_roll,
        with_halo=with_halo)

    def _main_map(n, b):
        return (n, 0, b, 0)

    in_specs = [
        pl.BlockSpec((1, 1, TH, W), _main_map),          # depth tile
        pl.BlockSpec((1, Ci, TH, W), _main_map),         # image tile
    ]
    operands = [depth, image]

    if with_halo:
        def _halo_map(n, b):
            # First row of the next H-tile (clamped; clamped/unused are masked).
            return (n, 0, jnp.minimum((b + 1) * halo_step, max_halo_idx), 0)

        in_specs += [
            pl.BlockSpec((1, 1, halo_bh, W), _halo_map),   # depth halo row(s)
            pl.BlockSpec((1, Ci, halo_bh, W), _halo_map),  # image halo row(s)
        ]
        operands += [depth, image]

    partials = pl.pallas_call(
        kernel,
        out_shape=jax.ShapeDtypeStruct((N, grid_h, 8, W), jnp.float32),
        grid=(N, grid_h),
        in_specs=in_specs,
        out_specs=pl.BlockSpec((1, 1, 8, W), lambda n, b: (n, b, 0, 0)),
        compiler_params=pltpu.CompilerParams(
            dimension_semantics=("parallel", "parallel"),
            vmem_limit_bytes=48 * 1024 * 1024,
        ),
    )(*operands)

    # Tiny final reduction over per-tile partial bands, done in plain JAX so
    # both grid axes stay fully parallel inside the kernel.
    return jnp.sum(partials).astype(depth.dtype)


def _reference_loss(depth, image):
    """Pure-JAX reference, mirrors the PyTorch module exactly."""
    gx = lambda x: x[:, :, :, :-1] - x[:, :, :, 1:]
    gy = lambda x: x[:, :, :-1, :] - x[:, :, 1:, :]
    ddx, ddy = gx(depth), gy(depth)
    idx, idy = gx(image), gy(image)
    wx = jnp.exp(-jnp.mean(jnp.abs(idx), axis=1, keepdims=True))
    wy = jnp.exp(-jnp.mean(jnp.abs(idy), axis=1, keepdims=True))
    return jnp.mean(jnp.abs(ddx * wx)) + jnp.mean(jnp.abs(ddy * wy))


if __name__ == "__main__":
    key = jax.random.PRNGKey(0)
    k_depth, k_image = jax.random.split(key)

    # Primary small test shape (single H-tile per batch element, no halo path).
    N, H, W = 2, 16, 16
    depth = jax.random.uniform(k_depth, (N, 1, H, W), dtype=jnp.float32)
    image = jax.random.uniform(k_image, (N, 3, H, W), dtype=jnp.float32)

    loss = jax.block_until_ready(depth_smoothness_loss(depth, image))
    ref = jax.block_until_ready(_reference_loss(depth, image))
    assert jnp.allclose(loss, ref, rtol=1e-5, atol=1e-6), (loss, ref)

    # Also exercise the multi-H-tile + halo path at a small shape.
    k2d, k2i = jax.random.split(jax.random.PRNGKey(1))
    depth2 = jax.random.uniform(k2d, (1, 1, 24, 16), dtype=jnp.float32)
    image2 = jax.random.uniform(k2i, (1, 3, 24, 16), dtype=jnp.float32)
    loss2 = jax.block_until_ready(
        depth_smoothness_loss(depth2, image2, row_tile=8))
    ref2 = jax.block_until_ready(_reference_loss(depth2, image2))
    assert jnp.allclose(loss2, ref2, rtol=1e-5, atol=1e-6), (loss2, ref2)

    print("KERNEL_OK")
</pallas_src>

<mosaic_0001>
module attributes {stable_mosaic.version = 11 : i64} {
  func.func @_depth_smooth_kernel(%arg0: i32, %arg1: i32, %arg2: memref<1x1x16x16xf32, #tpu.memory_space<vmem>>, %arg3: memref<1x3x16x16xf32, #tpu.memory_space<vmem>>, %arg4: memref<1x1x8x16xf32, #tpu.memory_space<vmem>>) attributes {dimension_semantics = [#tpu.dimension_semantics<parallel>, #tpu.dimension_semantics<parallel>], iteration_bounds = array<i64: 2, 1>, scalar_prefetch = 0 : i64, scratch_operands = 0 : i64, tpu.core_type = #tpu.core_type<tc>, window_params = [{transform_indices = @transform_0, window_bounds = array<i64: 1, 1, 16, 16>}, {transform_indices = @transform_1, window_bounds = array<i64: 1, 3, 16, 16>}, {transform_indices = @transform_2, window_bounds = array<i64: 1, 1, 8, 16>}]} {
    %c16_i32 = arith.constant 16 : i32
    %0 = arith.muli %arg1, %c16_i32 : i32
    %1 = tpu.iota {dimensions = array<i32: 0>} : vector<16x1xi32>
    %2 = vector.broadcast %0 : i32 to vector<16x1xi32>
    %3 = arith.addi %2, %1 : vector<16x1xi32>
    %4 = tpu.iota {dimensions = array<i32: 1>} : vector<1x16xi32>
    %c0 = arith.constant 0 : index
    %c0_0 = arith.constant 0 : index
    %c0_1 = arith.constant 0 : index
    %c0_2 = arith.constant 0 : index
    %5 = vector.load %arg2[%c0, %c0_0, %c0_1, %c0_2] : memref<1x1x16x16xf32, #tpu.memory_space<vmem>>, vector<1x1x16x16xf32>
    %6 = vector.shape_cast %5 : vector<1x1x16x16xf32> to vector<16x16xf32>
    %c0_3 = arith.constant 0 : index
    %c0_4 = arith.constant 0 : index
    %c0_5 = arith.constant 0 : index
    %c0_6 = arith.constant 0 : index
    %7 = vector.load %arg3[%c0_3, %c0_4, %c0_5, %c0_6] : memref<1x3x16x16xf32, #tpu.memory_space<vmem>>, vector<1x1x16x16xf32>
    %8 = vector.shape_cast %7 : vector<1x1x16x16xf32> to vector<16x16xf32>
    %9 = vector.extract_strided_slice %8 {offsets = [0, 1], sizes = [16, 15], strides = [1, 1]} : vector<16x16xf32> to vector<16x15xf32>
    %10 = vector.extract_strided_slice %8 {offsets = [0, 0], sizes = [16, 1], strides = [1, 1]} : vector<16x16xf32> to vector<16x1xf32>
    %11 = tpu.concatenate %9, %10 in 1 : vector<16x15xf32>, vector<16x1xf32> -> vector<16x16xf32>
    %12 = arith.subf %8, %11 : vector<16x16xf32>
    %13 = math.absf %12 : vector<16x16xf32>
    %c0_7 = arith.constant 0 : index
    %c1 = arith.constant 1 : index
    %c0_8 = arith.constant 0 : index
    %c0_9 = arith.constant 0 : index
    %14 = vector.load %arg3[%c0_7, %c1, %c0_8, %c0_9] : memref<1x3x16x16xf32, #tpu.memory_space<vmem>>, vector<1x1x16x16xf32>
    %15 = vector.shape_cast %14 : vector<1x1x16x16xf32> to vector<16x16xf32>
    %16 = vector.extract_strided_slice %15 {offsets = [0, 1], sizes = [16, 15], strides = [1, 1]} : vector<16x16xf32> to vector<16x15xf32>
    %17 = vector.extract_strided_slice %15 {offsets = [0, 0], sizes = [16, 1], strides = [1, 1]} : vector<16x16xf32> to vector<16x1xf32>
    %18 = tpu.concatenate %16, %17 in 1 : vector<16x15xf32>, vector<16x1xf32> -> vector<16x16xf32>
    %19 = arith.subf %15, %18 : vector<16x16xf32>
    %20 = math.absf %19 : vector<16x16xf32>
    %21 = arith.addf %13, %20 : vector<16x16xf32>
    %c0_10 = arith.constant 0 : index
    %c2 = arith.constant 2 : index
    %c0_11 = arith.constant 0 : index
    %c0_12 = arith.constant 0 : index
    %22 = vector.load %arg3[%c0_10, %c2, %c0_11, %c0_12] : memref<1x3x16x16xf32, #tpu.memory_space<vmem>>, vector<1x1x16x16xf32>
    %23 = vector.shape_cast %22 : vector<1x1x16x16xf32> to vector<16x16xf32>
    %24 = vector.extract_strided_slice %23 {offsets = [0, 1], sizes = [16, 15], strides = [1, 1]} : vector<16x16xf32> to vector<16x15xf32>
    %25 = vector.extract_strided_slice %23 {offsets = [0, 0], sizes = [16, 1], strides = [1, 1]} : vector<16x16xf32> to vector<16x1xf32>
    %26 = tpu.concatenate %24, %25 in 1 : vector<16x15xf32>, vector<16x1xf32> -> vector<16x16xf32>
    %27 = arith.subf %23, %26 : vector<16x16xf32>
    %28 = math.absf %27 : vector<16x16xf32>
    %29 = arith.addf %21, %28 : vector<16x16xf32>
    %cst = arith.constant -0.333333343 : f32
    %30 = vector.broadcast %cst : f32 to vector<16x16xf32>
    %31 = arith.mulf %29, %30 : vector<16x16xf32>
    %32 = math.exp %31 : vector<16x16xf32>
    %33 = vector.extract_strided_slice %6 {offsets = [0, 1], sizes = [16, 15], strides = [1, 1]} : vector<16x16xf32> to vector<16x15xf32>
    %34 = vector.extract_strided_slice %6 {offsets = [0, 0], sizes = [16, 1], strides = [1, 1]} : vector<16x16xf32> to vector<16x1xf32>
    %35 = tpu.concatenate %33, %34 in 1 : vector<16x15xf32>, vector<16x1xf32> -> vector<16x16xf32>
    %36 = arith.subf %6, %35 : vector<16x16xf32>
    %37 = arith.mulf %36, %32 : vector<16x16xf32>
    %38 = math.absf %37 : vector<16x16xf32>
    %c15_i32 = arith.constant 15 : i32
    %39 = vector.broadcast %c15_i32 : i32 to vector<1x16xi32>
    %40 = arith.cmpi slt, %4, %39 : vector<1x16xi32>
    %cst_13 = arith.constant 0.000000e+00 : f32
    %41 = vector.shape_cast %40 : vector<1x16xi1> to vector<1x16xi1>
    %42 = vector.broadcast %41 : vector<1x16xi1> to vector<16x16xi1>
    %43 = vector.broadcast %cst_13 : f32 to vector<16x16xf32>
    %44 = arith.select %42, %38, %43 : vector<16x16xi1>, vector<16x16xf32>
    %45 = vector.extract_strided_slice %44 {offsets = [0, 0], sizes = [8, 16], strides = [1, 1]} : vector<16x16xf32> to vector<8x16xf32>
    %46 = vector.extract_strided_slice %44 {offsets = [8, 0], sizes = [8, 16], strides = [1, 1]} : vector<16x16xf32> to vector<8x16xf32>
    %47 = arith.addf %45, %46 : vector<8x16xf32>
    %cst_14 = arith.constant 0.00208333344 : f32
    %48 = vector.broadcast %cst_14 : f32 to vector<8x16xf32>
    %49 = arith.mulf %47, %48 : vector<8x16xf32>
    %c0_15 = arith.constant 0 : index
    %c0_16 = arith.constant 0 : index
    %c0_17 = arith.constant 0 : index
    %c0_18 = arith.constant 0 : index
    %50 = vector.load %arg3[%c0_15, %c0_16, %c0_17, %c0_18] : memref<1x3x16x16xf32, #tpu.memory_space<vmem>>, vector<1x1x16x16xf32>
    %51 = vector.shape_cast %50 : vector<1x1x16x16xf32> to vector<16x16xf32>
    %52 = vector.extract_strided_slice %51 {offsets = [1, 0], sizes = [15, 16], strides = [1, 1]} : vector<16x16xf32> to vector<15x16xf32>
    %53 = vector.extract_strided_slice %51 {offsets = [0, 0], sizes = [1, 16], strides = [1, 1]} : vector<16x16xf32> to vector<1x16xf32>
    %54 = tpu.concatenate %52, %53 in 0 : vector<15x16xf32>, vector<1x16xf32> -> vector<16x16xf32>
    %55 = arith.subf %51, %54 : vector<16x16xf32>
    %56 = math.absf %55 : vector<16x16xf32>
    %c0_19 = arith.constant 0 : index
    %c1_20 = arith.constant 1 : index
    %c0_21 = arith.constant 0 : index
    %c0_22 = arith.constant 0 : index
    %57 = vector.load %arg3[%c0_19, %c1_20, %c0_21, %c0_22] : memref<1x3x16x16xf32, #tpu.memory_space<vmem>>, vector<1x1x16x16xf32>
    %58 = vector.shape_cast %57 : vector<1x1x16x16xf32> to vector<16x16xf32>
    %59 = vector.extract_strided_slice %58 {offsets = [1, 0], sizes = [15, 16], strides = [1, 1]} : vector<16x16xf32> to vector<15x16xf32>
    %60 = vector.extract_strided_slice %58 {offsets = [0, 0], sizes = [1, 16], strides = [1, 1]} : vector<16x16xf32> to vector<1x16xf32>
    %61 = tpu.concatenate %59, %60 in 0 : vector<15x16xf32>, vector<1x16xf32> -> vector<16x16xf32>
    %62 = arith.subf %58, %61 : vector<16x16xf32>
    %63 = math.absf %62 : vector<16x16xf32>
    %64 = arith.addf %56, %63 : vector<16x16xf32>
    %c0_23 = arith.constant 0 : index
    %c2_24 = arith.constant 2 : index
    %c0_25 = arith.constant 0 : index
    %c0_26 = arith.constant 0 : index
    %65 = vector.load %arg3[%c0_23, %c2_24, %c0_25, %c0_26] : memref<1x3x16x16xf32, #tpu.memory_space<vmem>>, vector<1x1x16x16xf32>
    %66 = vector.shape_cast %65 : vector<1x1x16x16xf32> to vector<16x16xf32>
    %67 = vector.extract_strided_slice %66 {offsets = [1, 0], sizes = [15, 16], strides = [1, 1]} : vector<16x16xf32> to vector<15x16xf32>
    %68 = vector.extract_strided_slice %66 {offsets = [0, 0], sizes = [1, 16], strides = [1, 1]} : vector<16x16xf32> to vector<1x16xf32>
    %69 = tpu.concatenate %67, %68 in 0 : vector<15x16xf32>, vector<1x16xf32> -> vector<16x16xf32>
    %70 = arith.subf %66, %69 : vector<16x16xf32>
    %71 = math.absf %70 : vector<16x16xf32>
    %72 = arith.addf %64, %71 : vector<16x16xf32>
    %cst_27 = arith.constant -0.333333343 : f32
    %73 = vector.broadcast %cst_27 : f32 to vector<16x16xf32>
    %74 = arith.mulf %72, %73 : vector<16x16xf32>
    %75 = math.exp %74 : vector<16x16xf32>
    %76 = vector.extract_strided_slice %6 {offsets = [1, 0], sizes = [15, 16], strides = [1, 1]} : vector<16x16xf32> to vector<15x16xf32>
    %77 = vector.extract_strided_slice %6 {offsets = [0, 0], sizes = [1, 16], strides = [1, 1]} : vector<16x16xf32> to vector<1x16xf32>
    %78 = tpu.concatenate %76, %77 in 0 : vector<15x16xf32>, vector<1x16xf32> -> vector<16x16xf32>
    %79 = arith.subf %6, %78 : vector<16x16xf32>
    %80 = arith.mulf %79, %75 : vector<16x16xf32>
    %81 = math.absf %80 : vector<16x16xf32>
    %c15_i32_28 = arith.constant 15 : i32
    %82 = vector.broadcast %c15_i32_28 : i32 to vector<16x1xi32>
    %83 = arith.cmpi slt, %3, %82 : vector<16x1xi32>
    %cst_29 = arith.constant 0.000000e+00 : f32
    %84 = vector.shape_cast %83 : vector<16x1xi1> to vector<16x1xi1>
    %85 = vector.broadcast %84 : vector<16x1xi1> to vector<16x16xi1>
    %86 = vector.broadcast %cst_29 : f32 to vector<16x16xf32>
    %87 = arith.select %85, %81, %86 : vector<16x16xi1>, vector<16x16xf32>
    %88 = vector.extract_strided_slice %87 {offsets = [0, 0], sizes = [8, 16], strides = [1, 1]} : vector<16x16xf32> to vector<8x16xf32>
    %89 = vector.extract_strided_slice %87 {offsets = [8, 0], sizes = [8, 16], strides = [1, 1]} : vector<16x16xf32> to vector<8x16xf32>
    %90 = arith.addf %88, %89 : vector<8x16xf32>
    %cst_30 = arith.constant 0.00208333344 : f32
    %91 = vector.broadcast %cst_30 : f32 to vector<8x16xf32>
    %92 = arith.mulf %90, %91 : vector<8x16xf32>
    %93 = arith.addf %49, %92 : vector<8x16xf32>
    %c0_31 = arith.constant 0 : index
    %c0_32 = arith.constant 0 : index
    %c0_33 = arith.constant 0 : index
    %c0_34 = arith.constant 0 : index
    %94 = vector.load %arg4[%c0_31, %c0_32, %c0_33, %c0_34] : memref<1x1x8x16xf32, #tpu.memory_space<vmem>>, vector<1x1x8x16xf32>
    %95 = vector.shape_cast %94 : vector<1x1x8x16xf32> to vector<8x16xf32>
    %96 = vector.shape_cast %93 : vector<8x16xf32> to vector<1x1x8x16xf32>
    tpu.vector_store %arg4[%c0_31, %c0_32, %c0_33, %c0_34], %96 {strides = array<i32>} : memref<1x1x8x16xf32, #tpu.memory_space<vmem>>, vector<1x1x8x16xf32>,
    return
  }
  func.func @transform_0(%arg0: i32, %arg1: i32) -> (i32, i32, i32, i32) {
    %c0_i32 = arith.constant 0 : i32
    %c0_i32_0 = arith.constant 0 : i32
    %c0_i32_1 = arith.constant 0 : i32
    return %arg0, %c0_i32, %arg1, %c0_i32_0 : i32, i32, i32, i32
  }
  func.func @transform_1(%arg0: i32, %arg1: i32) -> (i32, i32, i32, i32) {
    %c0_i32 = arith.constant 0 : i32
    %c0_i32_0 = arith.constant 0 : i32
    %c0_i32_1 = arith.constant 0 : i32
    return %arg0, %c0_i32, %arg1, %c0_i32_0 : i32, i32, i32, i32
  }
  func.func @transform_2(%arg0: i32, %arg1: i32) -> (i32, i32, i32, i32) {
    %c0_i32 = arith.constant 0 : i32
    %c0_i32_0 = arith.constant 0 : i32
    %c0_i32_1 = arith.constant 0 : i32
    return %arg0, %arg1, %c0_i32, %c0_i32_0 : i32, i32, i32, i32
  }
}

</mosaic_0001>

<llo_original>
// kernel: tpu_custom_call.1
$region0: #{tpu_custom_call.1}
  #allocation0 [shape = 'u32[]', space=smem, size = 0x4, offset = 0x4, fixed_abs, tag = 'smem constant byte address 0x4 - core index']
  #allocation1 [shape = 'u32[144,128]{1,0:T(1,128)}', space=vmem, size = 0x12000, scoped, tag = 'internal scratch']
  %s0 = inlined_call_operand.hbm [shape: f32[2,1,16,16], index: 0, kind: input, shape index: {}]
  %s1 = inlined_call_operand.hbm [shape: f32[2,3,16,16], index: 1, kind: input, shape index: {}]
  %s2 = inlined_call_operand.hbm [shape: f32[2,1,8,16], index: 2, kind: output, shape index: {}]
  %s3 = sld [smem:[#allocation0]]
  $region49: #{tpu_custom_call.1} parent=0
    _
  %s5 = ssub.s32 1, %s3
  %s6 = scalar_select 0, %s5, %s3
  $region1: #{tpu_custom_call.1} parent=0
    #allocation2 [shape = 'u8[16384]{0}', space=vmem, size = 0x4000, scoped, tag = 'input window, operand 0']
    #allocation3 [shape = 's32[2]{0}', space=sflag, size = 0x8, scoped, tag = 'scoped memory for tpu_custom_call.1']
    #allocation4 [shape = 's32[2]{0}', space=sflag, size = 0x8, scoped, tag = 'scoped memory for tpu_custom_call.1']
    #allocation5 [shape = 'u8[49152]{0}', space=vmem, size = 0xc000, scoped, tag = 'input window, operand 1']
    #allocation6 [shape = 's32[2]{0}', space=sflag, size = 0x8, scoped, tag = 'scoped memory for tpu_custom_call.1']
    #allocation7 [shape = 'u8[8192]{0}', space=vmem, size = 0x2000, scoped, tag = 'output window, operand 0']
    %7 = vsyncpa [#allocation3], 0
    %s8 = scalar_lea.sflag [#allocation3], 1
    %9 = vsyncpa %s8, 0
    %10 = vsyncpa [#allocation6], 0
    %s11 = scalar_lea.sflag [#allocation6], 1
    %12 = vsyncpa %s11, 0
    %13 = vsyncpa [#allocation4], 0
    %s14 = scalar_lea.sflag [#allocation4], 1
    %15 = vsyncpa %s14, 0
    loop: start=0, step=1, limit=4
    $region2: #{tpu_custom_call.1} parent=1 // loop_pre_header
      _
    $region3: #{tpu_custom_call.1} parent=1 // loop_header
      %s17 = sphi 0, %s21
      %p18 = scmp.ge.s32.totalorder %s17, 4
      %s24 = sphi 0, %s36
      %s25 = sphi 0, %s32
      %s26 = sphi 0, %s24
      %s27 = sphi 0, %s25
      %s28 = sphi 0, %s26
      %s29 = sphi 0, %s27
      %s41 = sphi 0, %s43
      %s44 = sphi 0, %s41
      %s45 = sphi 0, %s44
      %s61 = sphi 0, %s45
      %s69 = sphi 0, %s71
      %s72 = sphi 0, %s69
      %s73 = sphi 0, %s72
      %s89 = sphi 0, %s73
      %s97 = sphi 0, %s99
      %s100 = sphi 0, %s97
      %s101 = sphi 0, %s100
      %s117 = sphi 0, %s101
    $region4: #{tpu_custom_call.1} parent=1 // loop_header_branch
      %20 = sbr.rel (%p18) target = $region8
    $region5: #{tpu_custom_call.1} parent=1 // loop_body
      %s22 = ssub.s32 %s17, 1
      %s23 = ssub.s32 %s17, 2
      %s30 = sadd.s32 1, %s25
      %p31 = scmp.ge.s32.totalorder %s30, 1
      %s32 = scalar_select %p31, 0, %s30
      %s33 = sadd.s32 1, %s24
      %s34 = scalar_select %p31, %s33, %s24
      %p35 = scmp.ge.s32.totalorder %s34, 2
      %s36 = scalar_select %p35, 0, %s34
      %s37 = ssub.s32 %s24, %s36
      %s38 = ssub.s32 %s25, %s32
      %s39 = sor.u32 %s37, %s38
      %p40 = scmp.eq.s32.totalorder %s39, 0
      %s42 = sadd.s32 %s41, 1
      %s43 = scalar_select %p40, %s41, %s42
      %p46 = pneg %p40
      %p47 = scmp.eq.s32.totalorder %s17, 1
      %p48 = por %p46, %p47
      %p49 = scmp.ne.s32.totalorder %s41, %s44
      %p50 = scmp.eq.s32.totalorder %s17, 0
      %p51 = por %p49, %p50
      %p52 = scmp.ne.s32.totalorder %s41, %s44
      %p53 = scmp.eq.s32.totalorder %s22, 1
      %p54 = por %p52, %p53
      %p55 = scmp.ne.s32.totalorder %s44, %s45
      %p56 = scmp.eq.s32.totalorder %s22, 0
      %p57 = por %p55, %p56
      %p58 = scmp.ne.s32.totalorder %s44, %s45
      %p59 = scmp.eq.s32.totalorder %s23, 1
      %p60 = por %p58, %p59
      %p62 = scmp.ne.s32.totalorder %s45, %s61
      %p63 = scmp.eq.s32.totalorder %s23, 0
      %p64 = por %p62, %p63
      %s65 = ssub.s32 %s24, %s36
      %s66 = ssub.s32 %s25, %s32
      %s67 = sor.u32 %s65, %s66
      %p68 = scmp.eq.s32.totalorder %s67, 0
      %s70 = sadd.s32 %s69, 1
      %s71 = scalar_select %p68, %s69, %s70
      %p74 = pneg %p68
      %p75 = scmp.eq.s32.totalorder %s17, 1
      %p76 = por %p74, %p75
      %p77 = scmp.ne.s32.totalorder %s69, %s72
      %p78 = scmp.eq.s32.totalorder %s17, 0
      %p79 = por %p77, %p78
      %p80 = scmp.ne.s32.totalorder %s69, %s72
      %p81 = scmp.eq.s32.totalorder %s22, 1
      %p82 = por %p80, %p81
      %p83 = scmp.ne.s32.totalorder %s72, %s73
      %p84 = scmp.eq.s32.totalorder %s22, 0
      %p85 = por %p83, %p84
      %p86 = scmp.ne.s32.totalorder %s72, %s73
      %p87 = scmp.eq.s32.totalorder %s23, 1
      %p88 = por %p86, %p87
      %p90 = scmp.ne.s32.totalorder %s73, %s89
      %p91 = scmp.eq.s32.totalorder %s23, 0
      %p92 = por %p90, %p91
      %s93 = ssub.s32 %s24, %s36
      %s94 = ssub.s32 %s25, %s32
      %s95 = sor.u32 %s93, %s94
      %p96 = scmp.eq.s32.totalorder %s95, 0
      %s98 = sadd.s32 %s97, 1
      %s99 = scalar_select %p96, %s97, %s98
      %p102 = pneg %p96
      %p103 = scmp.eq.s32.totalorder %s17, 1
      %p104 = por %p102, %p103
      %p105 = scmp.ne.s32.totalorder %s97, %s100
      %p106 = scmp.eq.s32.totalorder %s17, 0
      %p107 = por %p105, %p106
      %p108 = scmp.ne.s32.totalorder %s97, %s100
      %p109 = scmp.eq.s32.totalorder %s22, 1
      %p110 = por %p108, %p109
      %p111 = scmp.ne.s32.totalorder %s100, %s101
      %p112 = scmp.eq.s32.totalorder %s22, 0
      %p113 = por %p111, %p112
      %p114 = scmp.ne.s32.totalorder %s100, %s101
      %p115 = scmp.eq.s32.totalorder %s23, 1
      %p116 = por %p114, %p115
      %p118 = scmp.ne.s32.totalorder %s101, %s117
      %p119 = scmp.eq.s32.totalorder %s23, 0
      %p120 = por %p118, %p119
      %p121 = scmp.le.s32.totalorder 1, %s17
      %p122 = scmp.lt.s32.totalorder %s17, 3
      %p123 = pnand %p121, %p122
      %p124 = pneg %p123
      // Predicated region
      $region9: #{tpu_custom_call.1} parent=5 // pred_check
        _
      $region10: #{tpu_custom_call.1} parent=5 // pred_check_branch
        %126 = sbr.rel (%p123) target = $region12
      $region11: #{tpu_custom_call.1} parent=5 // pred_region
        %s127 = ssub.s32 %s17, 1
      $region12: #{tpu_custom_call.1} parent=5 // pred_fallthru
        _
      %p128 = scmp.lt.s32.totalorder %s17, 2
      // Predicated region
      $region13: #{tpu_custom_call.1} parent=5 // pred_check
        %p129 = pneg %p128
      $region14: #{tpu_custom_call.1} parent=5 // pred_check_branch
        %131 = sbr.rel (%p129) target = $region16
      $region15: #{tpu_custom_call.1} parent=5 // pred_region
        // Predicated region
        $region17: #{tpu_custom_call.1} parent=15 // pred_check
          %p132 = pneg %p51
        $region18: #{tpu_custom_call.1} parent=15 // pred_check_branch
          %134 = sbr.rel (%p132) target = $region20
        $region19: #{tpu_custom_call.1} parent=15 // pred_region
          %s135 = sand.u32 %s41, 1
          %s136 = scalar_lea.sflag [#allocation3], %s135
          %s137 = sand.u32 %s41, 1
          %s138 = smul.addr %s137, 16
          %s139 = scalar_lea.vmem [#allocation2], %s138
          %s140 = smul.u32 2, %s25
          %s142 = ssub.s32 256, 256
          %143 = vsyncadd %s136, %s142
          %s144 = smul.addr %s24, 2
          %s145 = sadd.s32 %s140, %s144
          %s146 = smul.addr %s145, 128
          %s147 = scalar_lea.hbm %s0, %s146
          %s148 = sshll.u32 %s139, 4
          %s149 = int_to_ptr.vmem [resolvable:$true] %s148
          %154 = dma.hbm_to_vmem [thread:$0]  %s147, 256, %s149, %s136, 128, 128, 8
        $region20: #{tpu_custom_call.1} parent=15 // pred_fallthru
          _
        // Predicated region
        $region21: #{tpu_custom_call.1} parent=15 // pred_check
          %p155 = pneg %p79
        $region22: #{tpu_custom_call.1} parent=15 // pred_check_branch
          %157 = sbr.rel (%p155) target = $region24
        $region23: #{tpu_custom_call.1} parent=15 // pred_region
          %s158 = sand.u32 %s69, 1
          %s159 = scalar_lea.sflag [#allocation6], %s158
          %s160 = sand.u32 %s69, 1
          %s161 = smul.addr %s160, 48
          %s162 = scalar_lea.vmem [#allocation5], %s161
          %s163 = smul.u32 2, %s25
          %s165 = ssub.s32 768, 768
          %166 = vsyncadd %s159, %s165
          %s167 = smul.addr %s24, 6
          %s168 = sadd.s32 %s163, %s167
          %s169 = smul.addr %s168, 128
          %s170 = scalar_lea.hbm %s1, %s169
          %s171 = sshll.u32 %s162, 4
          %s172 = int_to_ptr.vmem [resolvable:$true] %s171
          %177 = dma.hbm_to_vmem [thread:$0]  %s170, 768, %s172, %s159, 128, 128, 8
        $region24: #{tpu_custom_call.1} parent=15 // pred_fallthru
          _
      $region16: #{tpu_custom_call.1} parent=5 // pred_fallthru
        _
      %p178 = scmp.le.s32.totalorder 1, %s17
      %p179 = scmp.lt.s32.totalorder %s17, 3
      %p180 = pnand %p178, %p179
      %p181 = pneg %p180
      // Predicated region
      $region25: #{tpu_custom_call.1} parent=5 // pred_check
        _
      $region26: #{tpu_custom_call.1} parent=5 // pred_check_branch
        %183 = sbr.rel (%p180) target = $region28
      $region27: #{tpu_custom_call.1} parent=5 // pred_region
        %s184 = ssub.s32 %s17, 1
        %s185 = sand.u32 %s44, 1
        %s186 = scalar_lea.sflag [#allocation3], %s185
        %s187 = sand.u32 %s44, 1
        %s188 = smul.addr %s187, 16
        %s189 = scalar_lea.vmem [#allocation2], %s188
        // Predicated region
        $region29: #{tpu_custom_call.1} parent=27 // pred_check
          %p190 = pneg %p57
        $region30: #{tpu_custom_call.1} parent=27 // pred_check_branch
          %192 = sbr.rel (%p190) target = $region32
        $region31: #{tpu_custom_call.1} parent=27 // pred_region
          %193 = dma.done %s186, 256
        $region32: #{tpu_custom_call.1} parent=27 // pred_fallthru
          _
        %s194 = sand.u32 %s72, 1
        %s195 = scalar_lea.sflag [#allocation6], %s194
        %s196 = sand.u32 %s72, 1
        %s197 = smul.addr %s196, 48
        %s198 = scalar_lea.vmem [#allocation5], %s197
        // Predicated region
        $region33: #{tpu_custom_call.1} parent=27 // pred_check
          %p199 = pneg %p85
        $region34: #{tpu_custom_call.1} parent=27 // pred_check_branch
          %201 = sbr.rel (%p199) target = $region36
        $region35: #{tpu_custom_call.1} parent=27 // pred_region
          %202 = dma.done %s195, 768
        $region36: #{tpu_custom_call.1} parent=27 // pred_fallthru
          _
        %s203 = sand.u32 %s44, 1
        %s204 = scalar_lea.sflag [#allocation3], %s203
        %s205 = sand.u32 %s44, 1
        %s206 = smul.addr %s205, 16
        %s207 = scalar_lea.vmem [#allocation2], %s206
        %p208 = pneg %p57
        %p209 = pneg %p54
        %s210 = sand.u32 %s72, 1
        %s211 = scalar_lea.sflag [#allocation6], %s210
        %s212 = sand.u32 %s72, 1
        %s213 = smul.addr %s212, 48
        %s214 = scalar_lea.vmem [#allocation5], %s213
        %p215 = pneg %p85
        %p216 = pneg %p82
        %p217 = pneg %p113
        %p218 = pneg %p110
        %s219 = sand.u32 %s100, 1
        %s220 = scalar_lea.sflag [#allocation4], %s219
        %s221 = sand.u32 %s100, 1
        %s222 = smul.addr %s221, 8
        %s223 = scalar_lea.vmem [#allocation7], %s222
        %s224 = smul.u32 2, %s27
        %s225 = smul.u32 2, %s27
        %s226 = smul.u32 %s27, 16
        %v227 = vlaneseq
        %v228 = vshrl.u32 %v227, 7
        %v229 = vadd.s32 %v228, 8
        %v230 = vstv %s226
        %v231 = vadd.s32 %v230, %v228
        %v232 = vadd.s32 %v230, %v229
        %v233 = vlaneseq
        %v234 = vand.u32 %v233, 127
        %v235 = vld [vmem:[%s189] sm:$0xff]
        %v236 = vld [vmem:[%s189 + $0x8] sm:$0xff]
        %v237 = vld [vmem:[%s198] sm:$0xff]
        %v238 = vld [vmem:[%s198 + $0x8] sm:$0xff]
        %241 = vrot.lane.b32.xlu0 %v237, 127
        %v242 = vpop.permute.xlu0 %241
        %243 = vrot.lane.b32.xlu0 %v238, 127
        %v244 = vpop.permute.xlu0 %243
        %247 = vrot.lane.b32.xlu0 %v237, 15
        %v248 = vpop.permute.xlu0 %247
        %249 = vrot.lane.b32.xlu0 %v238, 15
        %v250 = vpop.permute.xlu0 %249
        %vm253 = vcmask 121856
        %v254 = vsel %vm253, %v242, %v248
        %v255 = vsel %vm253, %v244, %v250
        %v256 = vsub.f32 %v237, %v254
        %v257 = vsub.f32 %v238, %v255
        %v258 = vand.u32 2147483647, %v256
        %v259 = vand.u32 2147483647, %v257
        %s260 = scalar_lea.vmem %s198, 16 [#allocation5]
        %v261 = vld [vmem:[%s260] sm:$0xff]
        %v262 = vld [vmem:[%s260 + $0x8] sm:$0xff]
        %265 = vrot.lane.b32.xlu0 %v261, 127
        %v266 = vpop.permute.xlu0 %265
        %267 = vrot.lane.b32.xlu0 %v262, 127
        %v268 = vpop.permute.xlu0 %267
        %271 = vrot.lane.b32.xlu0 %v261, 15
        %v272 = vpop.permute.xlu0 %271
        %273 = vrot.lane.b32.xlu0 %v262, 15
        %v274 = vpop.permute.xlu0 %273
        %v277 = vsel %vm253, %v266, %v272
        %v278 = vsel %vm253, %v268, %v274
        %v279 = vsub.f32 %v261, %v277
        %v280 = vsub.f32 %v262, %v278
        %v281 = vand.u32 2147483647, %v279
        %v282 = vand.u32 2147483647, %v280
        %v283 = vadd.f32 %v258, %v281
        %v284 = vadd.f32 %v259, %v282
        %s285 = scalar_lea.vmem %s198, 32 [#allocation5]
        %v286 = vld [vmem:[%s285] sm:$0xff]
        %v287 = vld [vmem:[%s285 + $0x8] sm:$0xff]
        %290 = vrot.lane.b32.xlu0 %v286, 127
        %v291 = vpop.permute.xlu0 %290
        %292 = vrot.lane.b32.xlu0 %v287, 127
        %v293 = vpop.permute.xlu0 %292
        %296 = vrot.lane.b32.xlu0 %v286, 15
        %v297 = vpop.permute.xlu0 %296
        %298 = vrot.lane.b32.xlu0 %v287, 15
        %v299 = vpop.permute.xlu0 %298
        %v302 = vsel %vm253, %v291, %v297
        %v303 = vsel %vm253, %v293, %v299
        %v304 = vsub.f32 %v286, %v302
        %v305 = vsub.f32 %v287, %v303
        %v306 = vand.u32 2147483647, %v304
        %v307 = vand.u32 2147483647, %v305
        %v308 = vadd.f32 %v283, %v306
        %v309 = vadd.f32 %v284, %v307
        %v310 = vmul.f32 %v308, -0.33333334
        %v311 = vmul.f32 %v309, -0.33333334
        %v312 = vmul.f32 %v310, 1.442695
        %v313 = vpow.pop %v312
        %v314 = vmul.f32 %v311, 1.442695
        %v315 = vpow.pop %v314
        %318 = vrot.lane.b32.xlu0 %v235, 127
        %v319 = vpop.permute.xlu0 %318
        %320 = vrot.lane.b32.xlu0 %v236, 127
        %v321 = vpop.permute.xlu0 %320
        %324 = vrot.lane.b32.xlu0 %v235, 15
        %v325 = vpop.permute.xlu0 %324
        %326 = vrot.lane.b32.xlu0 %v236, 15
        %v327 = vpop.permute.xlu0 %326
        %v330 = vsel %vm253, %v319, %v325
        %v331 = vsel %vm253, %v321, %v327
        %v332 = vsub.f32 %v235, %v330
        %v333 = vsub.f32 %v236, %v331
        %v334 = vmul.f32 %v332, %v313
        %v335 = vmul.f32 %v333, %v315
        %v336 = vand.u32 2147483647, %v334
        %v337 = vand.u32 2147483647, %v335
        %vm338 = vcmp.lt.s32.totalorder %v234, 15
        %v339 = vsel %vm338, 1, 0
        %vm340 = vcmp.eq.s32.totalorder %v339, 1
        %v341 = vsel %vm340, %v336, 0.0
        %v342 = vsel %vm340, %v337, 0.0
        %v343 = vadd.f32 %v341, %v342
        %v344 = vmul.f32 %v343, 0.0020833334
        %vm345 = vcmask 1046528
        %v346 = vrot.slane %v237, 1
        %v347 = vrot.slane %v238, 1
        %v348 = vsel %vm345, %v346, %v347
        %v352 = vsel %vm345, %v347, %v346
        %v353 = vsub.f32 %v237, %v348
        %v354 = vsub.f32 %v238, %v352
        %v355 = vand.u32 2147483647, %v353
        %v356 = vand.u32 2147483647, %v354
        %v357 = vrot.slane %v261, 1
        %v358 = vrot.slane %v262, 1
        %v359 = vsel %vm345, %v357, %v358
        %v363 = vsel %vm345, %v358, %v357
        %v364 = vsub.f32 %v261, %v359
        %v365 = vsub.f32 %v262, %v363
        %v366 = vand.u32 2147483647, %v364
        %v367 = vand.u32 2147483647, %v365
        %v368 = vadd.f32 %v355, %v366
        %v369 = vadd.f32 %v356, %v367
        %v370 = vrot.slane %v286, 1
        %v371 = vrot.slane %v287, 1
        %v372 = vsel %vm345, %v370, %v371
        %v376 = vsel %vm345, %v371, %v370
        %v377 = vsub.f32 %v286, %v372
        %v378 = vsub.f32 %v287, %v376
        %v379 = vand.u32 2147483647, %v377
        %v380 = vand.u32 2147483647, %v378
        %v381 = vadd.f32 %v368, %v379
        %v382 = vadd.f32 %v369, %v380
        %v383 = vmul.f32 %v381, -0.33333334
        %v384 = vmul.f32 %v382, -0.33333334
        %v385 = vmul.f32 %v383, 1.442695
        %v386 = vpow.pop %v385
        %v387 = vmul.f32 %v384, 1.442695
        %v388 = vpow.pop %v387
        %v389 = vrot.slane %v235, 1
        %v390 = vrot.slane %v236, 1
        %v391 = vsel %vm345, %v389, %v390
        %v395 = vsel %vm345, %v390, %v389
        %v396 = vsub.f32 %v235, %v391
        %v397 = vsub.f32 %v236, %v395
        %v398 = vmul.f32 %v396, %v386
        %v399 = vmul.f32 %v397, %v388
        %v400 = vand.u32 2147483647, %v398
        %v401 = vand.u32 2147483647, %v399
        %vm402 = vcmp.lt.s32.totalorder %v231, 15
        %vm403 = vcmp.lt.s32.totalorder %v232, 15
        %v404 = vsel %vm402, 1, 0
        %v405 = vsel %vm403, 1, 0
        %vm406 = vcmp.eq.s32.totalorder %v404, 1
        %vm407 = vcmp.eq.s32.totalorder %v405, 1
        %v408 = vsel %vm406, %v400, 0.0
        %v409 = vsel %vm407, %v401, 0.0
        %v410 = vadd.f32 %v408, %v409
        %v411 = vmul.f32 %v410, 0.0020833334
        %v412 = vadd.f32 %v344, %v411
        %vm413 = vcmask 130048
        %414 = vst.msk [vmem:[%s223] sm:$0xff] %vm413, %v412
        %s415 = sand.u32 %s100, 1
        %s416 = scalar_lea.sflag [#allocation4], %s415
        %s417 = sand.u32 %s100, 1
        %s418 = smul.addr %s417, 8
        %s419 = scalar_lea.vmem [#allocation7], %s418
        // Predicated region
        $region37: #{tpu_custom_call.1} parent=27 // pred_check
          %p420 = pneg %p110
        $region38: #{tpu_custom_call.1} parent=27 // pred_check_branch
          %422 = sbr.rel (%p420) target = $region40
        $region39: #{tpu_custom_call.1} parent=27 // pred_region
          %s424 = ssub.s32 128, 128
          %425 = vsyncadd %s416, %s424
          %s426 = sadd.s32 %s27, %s26
          %s427 = smul.addr %s426, 128
          %s428 = scalar_lea.hbm %s2, %s427
          %s430 = sshll.u32 %s419, 4
          %s431 = int_to_ptr.vmem [resolvable:$true] %s430
          %433 = dma.vmem_to_hbm [thread:$0]  %s431, 128, %s428, %s416
        $region40: #{tpu_custom_call.1} parent=27 // pred_fallthru
          _
      $region28: #{tpu_custom_call.1} parent=5 // pred_fallthru
        _
      %p434 = scmp.le.s32.totalorder 2, %s17
      // Predicated region
      $region41: #{tpu_custom_call.1} parent=5 // pred_check
        %p435 = pneg %p434
      $region42: #{tpu_custom_call.1} parent=5 // pred_check_branch
        %437 = sbr.rel (%p435) target = $region44
      $region43: #{tpu_custom_call.1} parent=5 // pred_region
        %s438 = ssub.s32 %s17, 2
        // Predicated region
        $region45: #{tpu_custom_call.1} parent=43 // pred_check
          %p439 = pneg %p116
        $region46: #{tpu_custom_call.1} parent=43 // pred_check_branch
          %441 = sbr.rel (%p439) target = $region48
        $region47: #{tpu_custom_call.1} parent=43 // pred_region
          %s442 = sand.u32 %s101, 1
          %s443 = scalar_lea.sflag [#allocation4], %s442
          %s444 = sand.u32 %s101, 1
          %s445 = smul.addr %s444, 8
          %s446 = scalar_lea.vmem [#allocation7], %s445
          %447 = dma.done %s443, 128
        $region48: #{tpu_custom_call.1} parent=43 // pred_fallthru
          _
      $region44: #{tpu_custom_call.1} parent=5 // pred_fallthru
        _
    $region6: #{tpu_custom_call.1} parent=1 // loop_footer
      %s21 = sadd.s32 1, %s17
    $region7: #{tpu_custom_call.1} parent=1 // loop_footer_branch
      %16 = sbr.rel target = $region3
    $region8: #{tpu_custom_call.1} parent=1 // loop_exit
      _
    %448 = vsyncpa [#allocation3], 1
    %s449 = scalar_lea.sflag [#allocation3], 1
    %450 = vsyncpa %s449, 1
    %451 = vsyncpa [#allocation6], 1
    %s452 = scalar_lea.sflag [#allocation6], 1
    %453 = vsyncpa %s452, 1
    %454 = vsyncpa [#allocation4], 1
    %s455 = scalar_lea.sflag [#allocation4], 1
    %456 = vsyncpa %s455, 1

</llo_original>
